<compile_context>
chip_gen: v7x
topology: tpu7x:2x2x1
jax: 0.10.0
libtpu: 0.0.40
codegen_flags: <defaults>
</compile_context>

<pallas_src>
import math

import jax
import jax.numpy as jnp
import numpy as np
from jax import lax
from jax.experimental import pallas as pl
from jax.experimental.pallas import tpu as pltpu

_LANES = 128
_MAX_BLOCK_ROWS = 8192          # 8192 x 128 f32 = 4 MiB per input block
_SMOOTH = 1e-6
_NEUTRAL_LOGIT = -40.0          # sigmoid(-40) ~ 4e-18, BCE(-40, 0) ~ 4e-18 -> negligible


def _round_up(x, m):
    return ((x + m - 1) // m) * m


def _make_kernel(block_rows, valid_rows, needs_mask):
    """Per-block lane-wise partial sums; no cross-block state (grid is parallel)."""

    def kernel(pred_ref, targ_ref, out_ref):
        x = pred_ref[...].astype(jnp.float32)
        t = targ_ref[...].astype(jnp.float32)

        if needs_mask:
            # Grid over-covers the rows: neutralize the ragged tail of the last block.
            # A few VPU ops per element, hidden under the DMA of this mem-bound kernel.
            rem = valid_rows - pl.program_id(0) * block_rows          # scalar
            row_ids = lax.broadcasted_iota(jnp.int32, x.shape, 0)
            m = row_ids < rem
            x = jnp.where(m, x, _NEUTRAL_LOGIT)
            t = jnp.where(m, t, 0.0)

        # Shared transcendental: e = exp(-|x|) feeds both softplus and sigmoid.
        e = jnp.exp(-jnp.abs(x))

        # Numerically stable BCE-with-logits (matches torch.nn.BCEWithLogitsLoss):
        #   max(x, 0) - x*t + log(1 + exp(-|x|))
        bce = jnp.maximum(x, 0.0) - x * t + jnp.log1p(e)

        # Numerically stable sigmoid reusing e:
        #   x >= 0: 1 / (1 + e)      x < 0: e / (1 + e)
        # Exact divide on purpose (approx reciprocal error would bias sum(p)/dice).
        p = jnp.where(x >= 0.0, 1.0, e) / (1.0 + e)

        # Reduce only along sublanes/rows here (cheap VPU adds); the cross-block and
        # cross-lane reduction happens once, outside the kernel.
        s_bce = jnp.sum(bce, axis=0, keepdims=True)                   # (1, 128)
        s_pt = jnp.sum(p * t, axis=0, keepdims=True)
        s_p = jnp.sum(p, axis=0, keepdims=True)
        s_t = jnp.sum(t, axis=0, keepdims=True)
        pad = jnp.zeros((4, _LANES), jnp.float32)
        # One unmasked 8-sublane, lane-dense store instead of four 1-sublane stores.
        out_ref[0, :, :] = jnp.concatenate([s_bce, s_pt, s_p, s_t, pad], axis=0)

    return kernel


def dice_bce_loss(pred, target):
    assert pred.shape == target.shape
    n = int(math.prod(pred.shape))

    pred_flat = pred.reshape(-1)
    targ_flat = target.reshape(-1)

    # Lane-dense (rows, 128) view needs n % 128 == 0.  Rare unaligned case pays a
    # lane-alignment pad with *neutral* values (logit=-40, target=0).
    # TODO(synk): avoid this copy entirely via 1-D blocks + element-level masking.
    if n % _LANES:
        pad = _LANES - n % _LANES
        pred_flat = jnp.concatenate(
            [pred_flat, jnp.full((pad,), _NEUTRAL_LOGIT, dtype=pred_flat.dtype)])
        targ_flat = jnp.concatenate(
            [targ_flat, jnp.zeros((pad,), dtype=targ_flat.dtype)])
    rows = pred_flat.shape[0] // _LANES

    # Sublane rounding respects sub-32-bit packing (f32 -> 8, bf16 -> 16, int8 -> 32).
    def _sub_mult(dt):
        return max(8, 32 // np.dtype(dt).itemsize)

    sub_mult = max(_sub_mult(pred.dtype), _sub_mult(target.dtype))

    # Aim for >= 2 blocks so the "parallel" grid axis can use both TensorCores on v7x;
    # cap at 4 MiB f32 per input block (16 MiB double-buffered inputs).
    block_rows = min(_MAX_BLOCK_ROWS, _round_up(pl.cdiv(rows, 2), sub_mult))
    block_rows = max(block_rows, sub_mult)
    num_blocks = pl.cdiv(rows, block_rows)
    needs_mask = num_blocks * block_rows != rows      # grid over-covers -> mask tail rows

    p2d = pred_flat.reshape(rows, _LANES)             # free reshape; original dtype
    t2d = targ_flat.reshape(rows, _LANES)

    kernel = _make_kernel(block_rows, rows, needs_mask)

    partials = pl.pallas_call(
        kernel,
        out_shape=jax.ShapeDtypeStruct((num_blocks, 8, _LANES), jnp.float32),
        grid_spec=pltpu.PrefetchScalarGridSpec(
            num_scalar_prefetch=0,
            grid=(num_blocks,),
            in_specs=[
                pl.BlockSpec((block_rows, _LANES), lambda i: (i, 0)),
                pl.BlockSpec((block_rows, _LANES), lambda i: (i, 0)),
            ],
            out_specs=pl.BlockSpec((1, 8, _LANES), lambda i: (i, 0, 0)),
        ),
        compiler_params=pltpu.CompilerParams(
            dimension_semantics=("parallel",),
            # v5e's ~16 MiB scoped default is too small for 4 MiB double-buffered
            # blocks; actual usage stays ~17 MiB, well inside every chip's VMEM.
            vmem_limit_bytes=64 << 20,
        ),
    )(p2d, t2d)

    # Tiny final combine (4 scalars) in plain JAX.
    sums = jnp.sum(partials, axis=(0, 2))             # [sum_bce, sum_pt, sum_p, sum_t, 0..]
    bce = sums[0] / jnp.float32(n)
    dice = (2.0 * sums[1] + _SMOOTH) / (sums[2] + sums[3] + _SMOOTH)
    return 0.5 * bce + (1.0 - dice)


def _reference_dice_bce(pred, target):
    x = pred.astype(jnp.float32)
    t = target.astype(jnp.float32)
    bce = jnp.mean(jnp.maximum(x, 0.0) - x * t + jnp.log1p(jnp.exp(-jnp.abs(x))))
    p = jax.nn.sigmoid(x)
    inter = jnp.sum(p * t)
    dice = (2.0 * inter + _SMOOTH) / (jnp.sum(p) + jnp.sum(t) + _SMOOTH)
    return 0.5 * bce + (1.0 - dice)


if __name__ == "__main__":
    key = jax.random.PRNGKey(0)

    # Primary case (NCHW, as the PyTorch module would see): aligned, no masking.
    # Two extra shapes exercise the over-covering-grid mask path and the
    # lane-alignment pad path.
    shapes = [(2, 4, 16, 16), (2, 4, 16, 20), (2, 3, 17, 19)]
    loss0 = None
    for shape in shapes:
        key, k1, k2 = jax.random.split(key, 3)
        pred = jax.random.normal(k1, shape, dtype=jnp.float32)
        target = (jax.random.uniform(k2, shape) > 0.5).astype(jnp.float32)

        loss = jax.block_until_ready(dice_bce_loss(pred, target))
        ref = jax.block_until_ready(_reference_dice_bce(pred, target))
        assert np.allclose(np.asarray(loss), np.asarray(ref), rtol=1e-5, atol=1e-5), (
            shape, float(loss), float(ref))
        if loss0 is None:
            loss0 = loss

    print("KERNEL_OK")
</pallas_src>

<mosaic_0001>
module attributes {stable_mosaic.version = 11 : i64} {
  func.func @kernel(%arg0: i32, %arg1: memref<8x128xf32, #tpu.memory_space<vmem>>, %arg2: memref<8x128xf32, #tpu.memory_space<vmem>>, %arg3: memref<1x8x128xf32, #tpu.memory_space<vmem>>) attributes {dimension_semantics = [#tpu.dimension_semantics<parallel>], iteration_bounds = array<i64: 2>, scalar_prefetch = 0 : i64, scratch_operands = 0 : i64, tpu.core_type = #tpu.core_type<tc>, window_params = [{transform_indices = @transform_0, window_bounds = array<i64: 8, 128>}, {transform_indices = @transform_1, window_bounds = array<i64: 8, 128>}, {transform_indices = @transform_2, window_bounds = array<i64: 1, 8, 128>}]} {
    %c0 = arith.constant 0 : index
    %c0_0 = arith.constant 0 : index
    %0 = vector.load %arg1[%c0, %c0_0] : memref<8x128xf32, #tpu.memory_space<vmem>>, vector<8x128xf32>
    %c0_1 = arith.constant 0 : index
    %c0_2 = arith.constant 0 : index
    %1 = vector.load %arg2[%c0_1, %c0_2] : memref<8x128xf32, #tpu.memory_space<vmem>>, vector<8x128xf32>
    %2 = math.absf %0 : vector<8x128xf32>
    %cst = arith.constant 0.000000e+00 : f32
    %3 = vector.broadcast %cst : f32 to vector<8x128xf32>
    %4 = arith.subf %3, %2 : vector<8x128xf32>
    %5 = math.exp %4 : vector<8x128xf32>
    %cst_3 = arith.constant 0.000000e+00 : f32
    %6 = vector.broadcast %cst_3 : f32 to vector<8x128xf32>
    %7 = arith.maximumf %0, %6 : vector<8x128xf32>
    %8 = arith.mulf %0, %1 : vector<8x128xf32>
    %9 = arith.subf %7, %8 : vector<8x128xf32>
    %10 = math.log1p %5 : vector<8x128xf32>
    %11 = arith.addf %9, %10 : vector<8x128xf32>
    %cst_4 = arith.constant 0.000000e+00 : f32
    %12 = vector.broadcast %cst_4 : f32 to vector<8x128xf32>
    %13 = arith.cmpf oge, %0, %12 : vector<8x128xf32>
    %cst_5 = arith.constant 1.000000e+00 : f32
    %14 = vector.broadcast %cst_5 : f32 to vector<8x128xf32>
    %15 = arith.select %13, %14, %5 : vector<8x128xi1>, vector<8x128xf32>
    %cst_6 = arith.constant 1.000000e+00 : f32
    %16 = vector.broadcast %cst_6 : f32 to vector<8x128xf32>
    %17 = arith.addf %16, %5 : vector<8x128xf32>
    %18 = arith.divf %15, %17 : vector<8x128xf32>
    %cst_7 = arith.constant dense<0.000000e+00> : vector<128xf32>
    %19 = vector.multi_reduction <add>, %11, %cst_7 [0] : vector<8x128xf32> to vector<128xf32>
    %20 = vector.shape_cast %19 : vector<128xf32> to vector<1x128xf32>
    %21 = arith.mulf %18, %1 : vector<8x128xf32>
    %cst_8 = arith.constant dense<0.000000e+00> : vector<128xf32>
    %22 = vector.multi_reduction <add>, %21, %cst_8 [0] : vector<8x128xf32> to vector<128xf32>
    %23 = vector.shape_cast %22 : vector<128xf32> to vector<1x128xf32>
    %cst_9 = arith.constant dense<0.000000e+00> : vector<128xf32>
    %24 = vector.multi_reduction <add>, %18, %cst_9 [0] : vector<8x128xf32> to vector<128xf32>
    %25 = vector.shape_cast %24 : vector<128xf32> to vector<1x128xf32>
    %cst_10 = arith.constant dense<0.000000e+00> : vector<128xf32>
    %26 = vector.multi_reduction <add>, %1, %cst_10 [0] : vector<8x128xf32> to vector<128xf32>
    %27 = vector.shape_cast %26 : vector<128xf32> to vector<1x128xf32>
    %cst_11 = arith.constant 0.000000e+00 : f32
    %28 = vector.broadcast %cst_11 : f32 to vector<4x128xf32>
    %29 = tpu.concatenate %20, %23, %25, %27, %28 in 0 : vector<1x128xf32>, vector<1x128xf32>, vector<1x128xf32>, vector<1x128xf32>, vector<4x128xf32> -> vector<8x128xf32>
    %c0_12 = arith.constant 0 : index
    %c0_13 = arith.constant 0 : index
    %c0_14 = arith.constant 0 : index
    %30 = vector.load %arg3[%c0_12, %c0_13, %c0_14] : memref<1x8x128xf32, #tpu.memory_space<vmem>>, vector<1x8x128xf32>
    %31 = vector.shape_cast %30 : vector<1x8x128xf32> to vector<8x128xf32>
    %32 = vector.shape_cast %29 : vector<8x128xf32> to vector<1x8x128xf32>
    tpu.vector_store %arg3[%c0_12, %c0_13, %c0_14], %32 {strides = array<i32>} : memref<1x8x128xf32, #tpu.memory_space<vmem>>, vector<1x8x128xf32>,
    return
  }
  func.func @transform_0(%arg0: i32) -> (i32, i32) {
    %c0_i32 = arith.constant 0 : i32
    %c0_i32_0 = arith.constant 0 : i32
    return %arg0, %c0_i32 : i32, i32
  }
  func.func @transform_1(%arg0: i32) -> (i32, i32) {
    %c0_i32 = arith.constant 0 : i32
    %c0_i32_0 = arith.constant 0 : i32
    return %arg0, %c0_i32 : i32, i32
  }
  func.func @transform_2(%arg0: i32) -> (i32, i32, i32) {
    %c0_i32 = arith.constant 0 : i32
    %c0_i32_0 = arith.constant 0 : i32
    %c0_i32_1 = arith.constant 0 : i32
    return %arg0, %c0_i32, %c0_i32_0 : i32, i32, i32
  }
}

</mosaic_0001>

<llo_original>
// kernel: tpu_custom_call.1
$region0: #{tpu_custom_call.1}
  #allocation0 [shape = 'u32[]', space=smem, size = 0x4, offset = 0x4, fixed_abs, tag = 'smem constant byte address 0x4 - core index']
  #allocation1 [shape = 'u32[144,128]{1,0:T(1,128)}', space=vmem, size = 0x12000, scoped, tag = 'internal scratch']
  %s0 = inlined_call_operand.hbm [shape: f32[16,128], index: 0, kind: input, shape index: {}]
  %s1 = inlined_call_operand.hbm [shape: f32[16,128], index: 1, kind: input, shape index: {}]
  %s2 = inlined_call_operand.hbm [shape: f32[2,8,128], index: 2, kind: output, shape index: {}]
  %s3 = sld [smem:[#allocation0]]
  $region49: #{tpu_custom_call.1} parent=0
    _
  %s5 = ssub.s32 1, %s3
  %s6 = scalar_select 0, %s5, %s3
  $region1: #{tpu_custom_call.1} parent=0
    #allocation2 [shape = 'u8[8192]{0}', space=vmem, size = 0x2000, scoped, tag = 'input window, operand 0']
    #allocation3 [shape = 's32[2]{0}', space=sflag, size = 0x8, scoped, tag = 'scoped memory for tpu_custom_call.1']
    #allocation4 [shape = 's32[2]{0}', space=sflag, size = 0x8, scoped, tag = 'scoped memory for tpu_custom_call.1']
    #allocation5 [shape = 'u8[8192]{0}', space=vmem, size = 0x2000, scoped, tag = 'input window, operand 1']
    #allocation6 [shape = 's32[2]{0}', space=sflag, size = 0x8, scoped, tag = 'scoped memory for tpu_custom_call.1']
    #allocation7 [shape = 'u8[8192]{0}', space=vmem, size = 0x2000, scoped, tag = 'output window, operand 0']
    %7 = vsyncpa [#allocation3], 0
    %s8 = scalar_lea.sflag [#allocation3], 1
    %9 = vsyncpa %s8, 0
    %10 = vsyncpa [#allocation6], 0
    %s11 = scalar_lea.sflag [#allocation6], 1
    %12 = vsyncpa %s11, 0
    %13 = vsyncpa [#allocation4], 0
    %s14 = scalar_lea.sflag [#allocation4], 1
    %15 = vsyncpa %s14, 0
    loop: start=0, step=1, limit=4
    $region2: #{tpu_custom_call.1} parent=1 // loop_pre_header
      _
    $region3: #{tpu_custom_call.1} parent=1 // loop_header
      %s17 = sphi 0, %s21
      %p18 = scmp.ge.s32.totalorder %s17, 4
      %s27 = sphi 0, %s29
      %s30 = sphi 0, %s27
      %s31 = sphi 0, %s30
      %s47 = sphi 0, %s31
      %s53 = sphi 0, %s55
      %s56 = sphi 0, %s53
      %s57 = sphi 0, %s56
      %s73 = sphi 0, %s57
      %s79 = sphi 0, %s81
      %s82 = sphi 0, %s79
      %s83 = sphi 0, %s82
      %s99 = sphi 0, %s83
    $region4: #{tpu_custom_call.1} parent=1 // loop_header_branch
      %20 = sbr.rel (%p18) target = $region8
    $region5: #{tpu_custom_call.1} parent=1 // loop_body
      %s22 = ssub.s32 %s17, 1
      %s23 = ssub.s32 %s17, 2
      %s24 = sadd.s32 %s17, 1
      %s25 = ssub.s32 %s17, %s24
      %p26 = scmp.eq.s32.totalorder %s25, 0
      %s28 = sadd.s32 %s27, 1
      %s29 = scalar_select %p26, %s27, %s28
      %p32 = pneg %p26
      %p33 = scmp.eq.s32.totalorder %s17, 1
      %p34 = por %p32, %p33
      %p35 = scmp.ne.s32.totalorder %s27, %s30
      %p36 = scmp.eq.s32.totalorder %s17, 0
      %p37 = por %p35, %p36
      %p38 = scmp.ne.s32.totalorder %s27, %s30
      %p39 = scmp.eq.s32.totalorder %s22, 1
      %p40 = por %p38, %p39
      %p41 = scmp.ne.s32.totalorder %s30, %s31
      %p42 = scmp.eq.s32.totalorder %s22, 0
      %p43 = por %p41, %p42
      %p44 = scmp.ne.s32.totalorder %s30, %s31
      %p45 = scmp.eq.s32.totalorder %s23, 1
      %p46 = por %p44, %p45
      %p48 = scmp.ne.s32.totalorder %s31, %s47
      %p49 = scmp.eq.s32.totalorder %s23, 0
      %p50 = por %p48, %p49
      %s51 = ssub.s32 %s17, %s24
      %p52 = scmp.eq.s32.totalorder %s51, 0
      %s54 = sadd.s32 %s53, 1
      %s55 = scalar_select %p52, %s53, %s54
      %p58 = pneg %p52
      %p59 = scmp.eq.s32.totalorder %s17, 1
      %p60 = por %p58, %p59
      %p61 = scmp.ne.s32.totalorder %s53, %s56
      %p62 = scmp.eq.s32.totalorder %s17, 0
      %p63 = por %p61, %p62
      %p64 = scmp.ne.s32.totalorder %s53, %s56
      %p65 = scmp.eq.s32.totalorder %s22, 1
      %p66 = por %p64, %p65
      %p67 = scmp.ne.s32.totalorder %s56, %s57
      %p68 = scmp.eq.s32.totalorder %s22, 0
      %p69 = por %p67, %p68
      %p70 = scmp.ne.s32.totalorder %s56, %s57
      %p71 = scmp.eq.s32.totalorder %s23, 1
      %p72 = por %p70, %p71
      %p74 = scmp.ne.s32.totalorder %s57, %s73
      %p75 = scmp.eq.s32.totalorder %s23, 0
      %p76 = por %p74, %p75
      %s77 = ssub.s32 %s17, %s24
      %p78 = scmp.eq.s32.totalorder %s77, 0
      %s80 = sadd.s32 %s79, 1
      %s81 = scalar_select %p78, %s79, %s80
      %p84 = pneg %p78
      %p85 = scmp.eq.s32.totalorder %s17, 1
      %p86 = por %p84, %p85
      %p87 = scmp.ne.s32.totalorder %s79, %s82
      %p88 = scmp.eq.s32.totalorder %s17, 0
      %p89 = por %p87, %p88
      %p90 = scmp.ne.s32.totalorder %s79, %s82
      %p91 = scmp.eq.s32.totalorder %s22, 1
      %p92 = por %p90, %p91
      %p93 = scmp.ne.s32.totalorder %s82, %s83
      %p94 = scmp.eq.s32.totalorder %s22, 0
      %p95 = por %p93, %p94
      %p96 = scmp.ne.s32.totalorder %s82, %s83
      %p97 = scmp.eq.s32.totalorder %s23, 1
      %p98 = por %p96, %p97
      %p100 = scmp.ne.s32.totalorder %s83, %s99
      %p101 = scmp.eq.s32.totalorder %s23, 0
      %p102 = por %p100, %p101
      %p103 = scmp.le.s32.totalorder 1, %s17
      %p104 = scmp.lt.s32.totalorder %s17, 3
      %p105 = pnand %p103, %p104
      %p106 = pneg %p105
      // Predicated region
      $region9: #{tpu_custom_call.1} parent=5 // pred_check
        _
      $region10: #{tpu_custom_call.1} parent=5 // pred_check_branch
        %108 = sbr.rel (%p105) target = $region12
      $region11: #{tpu_custom_call.1} parent=5 // pred_region
        %s109 = ssub.s32 %s17, 1
      $region12: #{tpu_custom_call.1} parent=5 // pred_fallthru
        _
      %p110 = scmp.lt.s32.totalorder %s17, 2
      // Predicated region
      $region13: #{tpu_custom_call.1} parent=5 // pred_check
        %p111 = pneg %p110
      $region14: #{tpu_custom_call.1} parent=5 // pred_check_branch
        %113 = sbr.rel (%p111) target = $region16
      $region15: #{tpu_custom_call.1} parent=5 // pred_region
        // Predicated region
        $region17: #{tpu_custom_call.1} parent=15 // pred_check
          %p114 = pneg %p37
        $region18: #{tpu_custom_call.1} parent=15 // pred_check_branch
          %116 = sbr.rel (%p114) target = $region20
        $region19: #{tpu_custom_call.1} parent=15 // pred_region
          %s117 = sand.u32 %s27, 1
          %s118 = scalar_lea.sflag [#allocation3], %s117
          %s119 = sand.u32 %s27, 1
          %s120 = smul.addr %s119, 8
          %s121 = scalar_lea.vmem [#allocation2], %s120
          %s123 = ssub.s32 128, 128
          %124 = vsyncadd %s118, %s123
          %s125 = smul.addr %s17, 128
          %s126 = scalar_lea.hbm %s0, %s125
          %s128 = sshll.u32 %s121, 4
          %s129 = int_to_ptr.vmem [resolvable:$true] %s128
          %131 = dma.hbm_to_vmem [thread:$0]  %s126, 128, %s129, %s118
        $region20: #{tpu_custom_call.1} parent=15 // pred_fallthru
          _
        // Predicated region
        $region21: #{tpu_custom_call.1} parent=15 // pred_check
          %p132 = pneg %p63
        $region22: #{tpu_custom_call.1} parent=15 // pred_check_branch
          %134 = sbr.rel (%p132) target = $region24
        $region23: #{tpu_custom_call.1} parent=15 // pred_region
          %s135 = sand.u32 %s53, 1
          %s136 = scalar_lea.sflag [#allocation6], %s135
          %s137 = sand.u32 %s53, 1
          %s138 = smul.addr %s137, 8
          %s139 = scalar_lea.vmem [#allocation5], %s138
          %s141 = ssub.s32 128, 128
          %142 = vsyncadd %s136, %s141
          %s143 = smul.addr %s17, 128
          %s144 = scalar_lea.hbm %s1, %s143
          %s146 = sshll.u32 %s139, 4
          %s147 = int_to_ptr.vmem [resolvable:$true] %s146
          %149 = dma.hbm_to_vmem [thread:$0]  %s144, 128, %s147, %s136
        $region24: #{tpu_custom_call.1} parent=15 // pred_fallthru
          _
      $region16: #{tpu_custom_call.1} parent=5 // pred_fallthru
        _
      %p150 = scmp.le.s32.totalorder 1, %s17
      %p151 = scmp.lt.s32.totalorder %s17, 3
      %p152 = pnand %p150, %p151
      %p153 = pneg %p152
      // Predicated region
      $region25: #{tpu_custom_call.1} parent=5 // pred_check
        _
      $region26: #{tpu_custom_call.1} parent=5 // pred_check_branch
        %155 = sbr.rel (%p152) target = $region28
      $region27: #{tpu_custom_call.1} parent=5 // pred_region
        %s156 = ssub.s32 %s17, 1
        %s157 = sand.u32 %s30, 1
        %s158 = scalar_lea.sflag [#allocation3], %s157
        %s159 = sand.u32 %s30, 1
        %s160 = smul.addr %s159, 8
        %s161 = scalar_lea.vmem [#allocation2], %s160
        // Predicated region
        $region29: #{tpu_custom_call.1} parent=27 // pred_check
          %p162 = pneg %p43
        $region30: #{tpu_custom_call.1} parent=27 // pred_check_branch
          %164 = sbr.rel (%p162) target = $region32
        $region31: #{tpu_custom_call.1} parent=27 // pred_region
          %165 = dma.done %s158, 128
        $region32: #{tpu_custom_call.1} parent=27 // pred_fallthru
          _
        %s166 = sand.u32 %s56, 1
        %s167 = scalar_lea.sflag [#allocation6], %s166
        %s168 = sand.u32 %s56, 1
        %s169 = smul.addr %s168, 8
        %s170 = scalar_lea.vmem [#allocation5], %s169
        // Predicated region
        $region33: #{tpu_custom_call.1} parent=27 // pred_check
          %p171 = pneg %p69
        $region34: #{tpu_custom_call.1} parent=27 // pred_check_branch
          %173 = sbr.rel (%p171) target = $region36
        $region35: #{tpu_custom_call.1} parent=27 // pred_region
          %174 = dma.done %s167, 128
        $region36: #{tpu_custom_call.1} parent=27 // pred_fallthru
          _
        %s175 = sand.u32 %s30, 1
        %s176 = scalar_lea.sflag [#allocation3], %s175
        %s177 = sand.u32 %s30, 1
        %s178 = smul.addr %s177, 8
        %s179 = scalar_lea.vmem [#allocation2], %s178
        %p180 = pneg %p43
        %p181 = pneg %p40
        %s182 = sand.u32 %s56, 1
        %s183 = scalar_lea.sflag [#allocation6], %s182
        %s184 = sand.u32 %s56, 1
        %s185 = smul.addr %s184, 8
        %s186 = scalar_lea.vmem [#allocation5], %s185
        %p187 = pneg %p69
        %p188 = pneg %p66
        %p189 = pneg %p95
        %p190 = pneg %p92
        %s191 = sand.u32 %s82, 1
        %s192 = scalar_lea.sflag [#allocation4], %s191
        %s193 = sand.u32 %s82, 1
        %s194 = smul.addr %s193, 8
        %s195 = scalar_lea.vmem [#allocation7], %s194
        %v196 = vld [vmem:[%s161] sm:$0xff]
        %v197 = vld [vmem:[%s170] sm:$0xff]
        %v198 = vand.u32 2147483647, %v196
        %v199 = vsub.f32 0.0, %v198
        %v200 = vmul.f32 %v199, 1.442695
        %v201 = vpow.pop %v200
        %v202 = vmax.f32 %v196, 0.0
        %v203 = vmul.f32 %v196, %v197
        %v204 = vsub.f32 %v202, %v203
        %v205 = vadd.f32 %v201, 1.0
        %v206 = vlog2.pop %v205
        %v207 = vmul.f32 %v206, 0.6931472
        %v208 = vmul.f32 -0.5, %v201
        %v209 = vadd.f32 %v208, 1.0
        %v210 = vmul.f32 %v209, %v201
        %v211 = vand.u32 2147483647, %v201
        %vm212 = vcmp.lt.f32.partialorder %v211, 0.0004427343
        %v213 = vsel %vm212, %v210, %v207
        %v214 = vadd.f32 %v204, %v213
        %vm215 = vcmp.ge.f32.partialorder %v196, 0.0
        %v216 = vsel %vm215, 1.0, %v201
        %v217 = vadd.f32 %v201, 1.0
        %v218 = vrcp.pop %v217
        %v219 = vmul.f32 %v216, %v218
        %v220 = vrot.slane %v214, 4
        %v221 = vadd.f32 %v214, %v220
        %v222 = vrot.slane %v221, 2
        %v223 = vadd.f32 %v221, %v222
        %v224 = vrot.slane %v223, 1
        %v225 = vadd.f32 %v223, %v224
        %v226 = vmul.f32 %v219, %v197
        %v227 = vrot.slane %v226, 4
        %v228 = vadd.f32 %v226, %v227
        %v229 = vrot.slane %v228, 2
        %v230 = vadd.f32 %v228, %v229
        %v231 = vrot.slane %v230, 1
        %v232 = vadd.f32 %v230, %v231
        %v233 = vrot.slane %v219, 4
        %v234 = vadd.f32 %v219, %v233
        %v235 = vrot.slane %v234, 2
        %v236 = vadd.f32 %v234, %v235
        %v237 = vrot.slane %v236, 1
        %v238 = vadd.f32 %v236, %v237
        %v239 = vrot.slane %v197, 4
        %v240 = vadd.f32 %v197, %v239
        %v241 = vrot.slane %v240, 2
        %v242 = vadd.f32 %v240, %v241
        %v243 = vrot.slane %v242, 1
        %v244 = vadd.f32 %v242, %v243
        %vm245 = vcmask 1040384
        %v246 = vsel %vm245, %v225, %v232
        %vm247 = vcmask 1041408
        %v248 = vsel %vm247, %v246, %v238
        %vm249 = vcmask 1042432
        %v250 = vsel %vm249, %v248, %v244
        %vm251 = vcmask 1043456
        %v252 = vsel %vm251, %v250, 0.0
        %253 = vst [vmem:[%s195] sm:$0xff] %v252
        %s254 = sand.u32 %s82, 1
        %s255 = scalar_lea.sflag [#allocation4], %s254
        %s256 = sand.u32 %s82, 1
        %s257 = smul.addr %s256, 8
        %s258 = scalar_lea.vmem [#allocation7], %s257
        // Predicated region
        $region37: #{tpu_custom_call.1} parent=27 // pred_check
          %p259 = pneg %p92
        $region38: #{tpu_custom_call.1} parent=27 // pred_check_branch
          %261 = sbr.rel (%p259) target = $region40
        $region39: #{tpu_custom_call.1} parent=27 // pred_region
          %s263 = ssub.s32 128, 128
          %264 = vsyncadd %s255, %s263
          %s265 = smul.addr %s22, 128
          %s266 = scalar_lea.hbm %s2, %s265
          %s268 = sshll.u32 %s258, 4
          %s269 = int_to_ptr.vmem [resolvable:$true] %s268
          %271 = dma.vmem_to_hbm [thread:$0]  %s269, 128, %s266, %s255
        $region40: #{tpu_custom_call.1} parent=27 // pred_fallthru
          _
      $region28: #{tpu_custom_call.1} parent=5 // pred_fallthru
        _
      %p272 = scmp.le.s32.totalorder 2, %s17
      // Predicated region
      $region41: #{tpu_custom_call.1} parent=5 // pred_check
        %p273 = pneg %p272
      $region42: #{tpu_custom_call.1} parent=5 // pred_check_branch
        %275 = sbr.rel (%p273) target = $region44
      $region43: #{tpu_custom_call.1} parent=5 // pred_region
        %s276 = ssub.s32 %s17, 2
        // Predicated region
        $region45: #{tpu_custom_call.1} parent=43 // pred_check
          %p277 = pneg %p98
        $region46: #{tpu_custom_call.1} parent=43 // pred_check_branch
          %279 = sbr.rel (%p277) target = $region48
        $region47: #{tpu_custom_call.1} parent=43 // pred_region
          %s280 = sand.u32 %s83, 1
          %s281 = scalar_lea.sflag [#allocation4], %s280
          %s282 = sand.u32 %s83, 1
          %s283 = smul.addr %s282, 8
          %s284 = scalar_lea.vmem [#allocation7], %s283
          %285 = dma.done %s281, 128
        $region48: #{tpu_custom_call.1} parent=43 // pred_fallthru
          _
      $region44: #{tpu_custom_call.1} parent=5 // pred_fallthru
        _
    $region6: #{tpu_custom_call.1} parent=1 // loop_footer
      %s21 = sadd.s32 1, %s17
    $region7: #{tpu_custom_call.1} parent=1 // loop_footer_branch
      %16 = sbr.rel target = $region3
    $region8: #{tpu_custom_call.1} parent=1 // loop_exit
      _
    %286 = vsyncpa [#allocation3], 1
    %s287 = scalar_lea.sflag [#allocation3], 1
    %288 = vsyncpa %s287, 1
    %289 = vsyncpa [#allocation6], 1
    %s290 = scalar_lea.sflag [#allocation6], 1
    %291 = vsyncpa %s290, 1
    %292 = vsyncpa [#allocation4], 1
    %s293 = scalar_lea.sflag [#allocation4], 1
    %294 = vsyncpa %s293, 1

</llo_original>
